<compile_context>
chip_gen: v6e
topology: v6e:2x2x1
jax: 0.10.0
libtpu: 0.0.40
codegen_flags: <defaults>
</compile_context>

<pallas_src>
import jax
import jax.numpy as jnp
import numpy as np
from jax.experimental import pallas as pl
from jax.experimental.pallas import tpu as pltpu

# ---------------------------------------------------------------------------
# Static model configuration (mirrors the PyTorch __init__ arguments)
# ---------------------------------------------------------------------------
Z_DIM = 16
C_DIM = 4
IN_DIM = Z_DIM + C_DIM
HIDDEN_DIM = 32
LAYERS = 2
CONDITION = True

# column layout of the generated row (x_dim = 13)
COL_TYPE = ["binary", "one-hot", "gmm", "normalize", "ordinal"]
COL_IND = [(0, 2), (2, 6), (6, 10), (10, 12), (12, 13)]
X_DIM = COL_IND[-1][1]

GN_EPS = 1e-5

LANE = 128                      # lane width (batch maps onto lanes)
MAX_TILE_B = 8192               # per-step batch tile (multiple of 128)
VMEM_LIMIT_BYTES = 48 * 1024 * 1024  # safe on v5e/v6e (128 MiB) and v7x (64 MiB)


def _cdiv(a, b):
    return (a + b - 1) // b


def _round_up(x, m):
    return _cdiv(x, m) * m


def _choose_tiling(batch):
    """Pick (tile_b, padded_batch, n_tiles).  Keep >= 2 tiles when the batch
    is big enough so the 'parallel' grid axis can use both v7x TensorCores."""
    b_al = _round_up(max(batch, 1), LANE)
    if b_al >= 2 * LANE:
        n_tiles = max(2, _cdiv(b_al, MAX_TILE_B))
    else:
        n_tiles = 1
    tile_b = _round_up(_cdiv(b_al, n_tiles), LANE)
    n_tiles = _cdiv(b_al, tile_b)
    return tile_b, tile_b * n_tiles, n_tiles


# ---------------------------------------------------------------------------
# Pallas kernel (feature-major: everything is (features, batch_tile))
# ---------------------------------------------------------------------------
def vgan_generator_kernel(
    zc_ref,      # (IN_DIM, TILE_B)            concat(z, c), transposed
    w_in_ref,    # (HIDDEN_DIM, IN_DIM)         input Linear weight, transposed
    wh_ref,      # (LAYERS, HIDDEN_DIM, HIDDEN_DIM)  hidden weights, transposed
    w_out_ref,   # (X_DIM, HIDDEN_DIM)          output weight, transposed
    hp_ref,      # (HIDDEN_DIM, 3 + 3*LAYERS)   packed [b, gamma, beta] per norm
    op_ref,      # (X_DIM, 3)                   packed [b_out, g_out, be_out]
    out_ref,     # (X_DIM, TILE_B)
):
    hp = hp_ref[...]
    op = op_ref[...]

    def groupnorm1(x, gamma, beta):
        # GroupNorm(num_groups=1): per-sample (per-lane) normalization over
        # the channel (sublane) axis.  Two-pass variance for robustness; the
        # reductions are short sublane reduces in this layout.
        inv_n = jnp.float32(1.0 / x.shape[0])
        mu = jnp.sum(x, axis=0, keepdims=True) * inv_n          # (1, B)
        d = x - mu
        var = jnp.sum(d * d, axis=0, keepdims=True) * inv_n     # (1, B)
        return d * (gamma * jax.lax.rsqrt(var + GN_EPS)) + beta

    # ---- input layer: Linear -> GroupNorm(1) -> relu ----------------------
    h = jnp.dot(w_in_ref[...], zc_ref[...], preferred_element_type=jnp.float32)
    h = h + hp[:, 0:1]
    h = jnp.maximum(groupnorm1(h, hp[:, 1:2], hp[:, 2:3]), 0.0)

    # ---- hidden stack (static unroll over layers) --------------------------
    for i in range(LAYERS):
        b = 3 + 3 * i
        h = jnp.dot(wh_ref[i], h, preferred_element_type=jnp.float32)
        h = h + hp[:, b:b + 1]
        h = jnp.maximum(groupnorm1(h, hp[:, b + 1:b + 2], hp[:, b + 2:b + 3]), 0.0)

    # ---- output layer: Linear -> GroupNorm(1) (no relu) --------------------
    x = jnp.dot(w_out_ref[...], h, preferred_element_type=jnp.float32) + op[:, 0:1]
    x = groupnorm1(x, op[:, 1:2], op[:, 2:3])

    # ---- per-row output activations ----------------------------------------
    # (X_DIM, 1) masks broadcast across lanes; no full-tile iota temporaries.
    rows = jax.lax.broadcasted_iota(jnp.int32, (X_DIM, 1), 0)

    def row_mask(sta, end):
        return (rows >= sta) & (rows < end)

    sig_mask = None
    sm_groups = []
    for col_type, (sta, end) in zip(COL_TYPE, COL_IND):
        if col_type in ("binary", "ordinal"):
            m = row_mask(sta, end)
            sig_mask = m if sig_mask is None else sig_mask | m
        elif col_type == "one-hot":
            sm_groups.append(row_mask(sta, end))
        elif col_type == "gmm":
            sm_groups.append(row_mask(sta + 1, end))
        # "normalize" rows and the gmm mean column fall through to tanh

    # sigmoid rows share the tanh pass: sigmoid(v) = 0.5*tanh(v/2) + 0.5
    if sig_mask is not None:
        t = jnp.tanh(jnp.where(sig_mask, 0.5 * x, x))
        base = jnp.where(sig_mask, 0.5 * t + 0.5, t)
    else:
        base = jnp.tanh(x)

    result = base
    if sm_groups:
        # both masked softmax groups share a single exp pass
        neg_big = jnp.float32(-1e30)
        shift = x                              # exp(0) = 1 on non-softmax rows
        for m in sm_groups:
            gm = jnp.max(jnp.where(m, x, neg_big), axis=0, keepdims=True)
            shift = jnp.where(m, gm, shift)
        e = jnp.exp(x - shift)
        sm = None
        sm_mask = None
        for m in sm_groups:
            eg = jnp.where(m, e, 0.0)
            dg = jnp.sum(eg, axis=0, keepdims=True)
            inv = pl.reciprocal(dg, approx=True)
            inv = inv * (2.0 - dg * inv)       # one Newton step
            term = eg * inv
            sm = term if sm is None else sm + term
            sm_mask = m if sm_mask is None else sm_mask | m
        result = jnp.where(sm_mask, sm, base)

    out_ref[...] = result


# ---------------------------------------------------------------------------
# Wrapper
# ---------------------------------------------------------------------------
@jax.jit
def vgan_generator_forward(params, z, c=None):
    assert CONDITION and c is not None

    batch = z.shape[0]
    tile_b, b_pad, n_tiles = _choose_tiling(batch)

    # Fold the torch.cat((z, c), dim=1) into one wrapper-side concat, pad the
    # batch, and go feature-major so the batch fills the lane axis.
    zc = jnp.concatenate([z, c], axis=1)                        # (B, IN_DIM)
    if b_pad != batch:
        zc = jnp.pad(zc, ((0, b_pad - batch), (0, 0)))
    zc_t = zc.T                                                  # (IN_DIM, b_pad)

    # Kernel-ready (transposed) weights and packed norm parameters.
    w_in_t = params["w_in"].T                                    # (H, IN_DIM)
    wh_t = jnp.transpose(params["wh"], (0, 2, 1))                # (L, H, H)
    w_out_t = params["w_out"].T                                  # (X_DIM, H)
    hp_cols = [params["b_in"], params["g_in"], params["be_in"]]
    for i in range(LAYERS):
        hp_cols += [params["bh"][i], params["gh"][i], params["beh"][i]]
    hp = jnp.stack(hp_cols, axis=1)                              # (H, 3+3L)
    op = jnp.stack(
        [params["b_out"], params["g_out"], params["be_out"]], axis=1
    )                                                            # (X_DIM, 3)
    n_hp = 3 + 3 * LAYERS

    in_specs = [
        pl.BlockSpec((IN_DIM, tile_b), lambda i: (0, i)),        # pipelined
        pl.BlockSpec((HIDDEN_DIM, IN_DIM), lambda i: (0, 0)),    # resident
        pl.BlockSpec((LAYERS, HIDDEN_DIM, HIDDEN_DIM), lambda i: (0, 0, 0)),
        pl.BlockSpec((X_DIM, HIDDEN_DIM), lambda i: (0, 0)),
        pl.BlockSpec((HIDDEN_DIM, n_hp), lambda i: (0, 0)),
        pl.BlockSpec((X_DIM, 3), lambda i: (0, 0)),
    ]
    out_spec = pl.BlockSpec((X_DIM, tile_b), lambda i: (0, i))

    matmul_flops = 2 * b_pad * (
        IN_DIM * HIDDEN_DIM + LAYERS * HIDDEN_DIM * HIDDEN_DIM + HIDDEN_DIM * X_DIM
    )
    vec_flops = 10 * b_pad * ((LAYERS + 1) * HIDDEN_DIM + 3 * X_DIM)
    param_bytes = 4 * (w_in_t.size + wh_t.size + w_out_t.size + hp.size + op.size)
    cost = pl.CostEstimate(
        flops=matmul_flops + vec_flops,
        transcendentals=b_pad * (2 * X_DIM + LAYERS + 4),
        bytes_accessed=4 * b_pad * (IN_DIM + X_DIM) + param_bytes,
    )

    out_t = pl.pallas_call(
        vgan_generator_kernel,
        out_shape=jax.ShapeDtypeStruct((X_DIM, b_pad), jnp.float32),
        grid=(n_tiles,),
        in_specs=in_specs,
        out_specs=out_spec,
        compiler_params=pltpu.CompilerParams(
            dimension_semantics=("parallel",),
            vmem_limit_bytes=VMEM_LIMIT_BYTES,
        ),
        cost_estimate=cost,
    )(zc_t, w_in_t, wh_t, w_out_t, hp, op)

    return out_t.T[:batch]


# ---------------------------------------------------------------------------
# Deterministic parameter construction (logical / PyTorch-style layout)
# ---------------------------------------------------------------------------
def init_params(key):
    ks = jax.random.split(key, 10)
    s = 0.1
    return {
        "w_in": s * jax.random.normal(ks[0], (IN_DIM, HIDDEN_DIM), jnp.float32),
        "b_in": s * jax.random.normal(ks[1], (HIDDEN_DIM,), jnp.float32),
        "g_in": 1.0 + s * jax.random.normal(ks[2], (HIDDEN_DIM,), jnp.float32),
        "be_in": s * jax.random.normal(ks[3], (HIDDEN_DIM,), jnp.float32),
        "wh": s * jax.random.normal(
            ks[4], (LAYERS, HIDDEN_DIM, HIDDEN_DIM), jnp.float32
        ),
        "bh": s * jax.random.normal(ks[5], (LAYERS, HIDDEN_DIM), jnp.float32),
        "gh": 1.0 + s * jax.random.normal(ks[6], (LAYERS, HIDDEN_DIM), jnp.float32),
        "beh": s * jax.random.normal(ks[7], (LAYERS, HIDDEN_DIM), jnp.float32),
        "w_out": s * jax.random.normal(ks[8], (HIDDEN_DIM, X_DIM), jnp.float32),
        "b_out": s * jax.random.normal(ks[9], (X_DIM,), jnp.float32),
        "g_out": jnp.ones((X_DIM,), jnp.float32),
        "be_out": jnp.zeros((X_DIM,), jnp.float32),
    }


# ---------------------------------------------------------------------------
# Pure-JAX reference (mirrors the PyTorch forward exactly) for verification
# ---------------------------------------------------------------------------
def reference_forward(params, z, c=None):
    def gn(x, g, b):
        mu = jnp.mean(x, axis=1, keepdims=True)
        var = jnp.mean((x - mu) ** 2, axis=1, keepdims=True)
        return (x - mu) / jnp.sqrt(var + GN_EPS) * g + b

    if CONDITION:
        z = jnp.concatenate([z, c], axis=1)
    h = z @ params["w_in"] + params["b_in"]
    h = jax.nn.relu(gn(h, params["g_in"], params["be_in"]))
    for i in range(LAYERS):
        h = h @ params["wh"][i] + params["bh"][i]
        h = jax.nn.relu(gn(h, params["gh"][i], params["beh"][i]))
    x = h @ params["w_out"] + params["b_out"]
    x = gn(x, params["g_out"], params["be_out"])
    outs = []
    for col_type, (sta, end) in zip(COL_TYPE, COL_IND):
        if col_type in ("binary", "ordinal"):
            outs.append(jax.nn.sigmoid(x[:, sta:end]))
        elif col_type == "normalize":
            outs.append(jnp.tanh(x[:, sta:end]))
        elif col_type == "one-hot":
            outs.append(jax.nn.softmax(x[:, sta:end], axis=1))
        elif col_type == "gmm":
            outs.append(jnp.tanh(x[:, sta:sta + 1]))
            outs.append(jax.nn.softmax(x[:, sta + 1:end], axis=1))
    return jnp.concatenate(outs, axis=1)


if __name__ == "__main__":
    key = jax.random.PRNGKey(0)
    k_p, k_z, k_c = jax.random.split(key, 3)

    params = init_params(k_p)
    batch = 8
    z = jax.random.normal(k_z, (batch, Z_DIM), jnp.float32)
    c = jax.random.normal(k_c, (batch, C_DIM), jnp.float32)

    out = vgan_generator_forward(params, z, c)
    out = jax.block_until_ready(out)

    ref = reference_forward(params, z, c)
    np.testing.assert_allclose(np.asarray(out), np.asarray(ref), atol=1e-4, rtol=1e-4)

    print("KERNEL_OK")
</pallas_src>

<mosaic_0001>
module attributes {stable_mosaic.version = 11 : i64} {
  func.func @vgan_generator_kernel(%arg0: i32, %arg1: memref<20x128xf32, #tpu.memory_space<vmem>>, %arg2: memref<32x20xf32, #tpu.memory_space<vmem>>, %arg3: memref<2x32x32xf32, #tpu.memory_space<vmem>>, %arg4: memref<13x32xf32, #tpu.memory_space<vmem>>, %arg5: memref<32x9xf32, #tpu.memory_space<vmem>>, %arg6: memref<13x3xf32, #tpu.memory_space<vmem>>, %arg7: memref<13x128xf32, #tpu.memory_space<vmem>>) attributes {dimension_semantics = [#tpu.dimension_semantics<parallel>], iteration_bounds = array<i64: 1>, scalar_prefetch = 0 : i64, scratch_operands = 0 : i64, tpu.core_type = #tpu.core_type<tc>, window_params = [{transform_indices = @transform_0, window_bounds = array<i64: 20, 128>}, {pipeline_mode = #tpu.pipeline_mode<synchronous>, transform_indices = @transform_1, window_bounds = array<i64: 32, 20>}, {pipeline_mode = #tpu.pipeline_mode<synchronous>, transform_indices = @transform_2, window_bounds = array<i64: 2, 32, 32>}, {pipeline_mode = #tpu.pipeline_mode<synchronous>, transform_indices = @transform_3, window_bounds = array<i64: 13, 32>}, {pipeline_mode = #tpu.pipeline_mode<synchronous>, transform_indices = @transform_4, window_bounds = array<i64: 32, 9>}, {pipeline_mode = #tpu.pipeline_mode<synchronous>, transform_indices = @transform_5, window_bounds = array<i64: 13, 3>}, {transform_indices = @transform_6, window_bounds = array<i64: 13, 128>}]} {
    %c0 = arith.constant 0 : index
    %c0_0 = arith.constant 0 : index
    %0 = vector.load %arg5[%c0, %c0_0] : memref<32x9xf32, #tpu.memory_space<vmem>>, vector<32x9xf32>
    %c0_1 = arith.constant 0 : index
    %c0_2 = arith.constant 0 : index
    %1 = vector.load %arg6[%c0_1, %c0_2] : memref<13x3xf32, #tpu.memory_space<vmem>>, vector<13x3xf32>
    %c0_3 = arith.constant 0 : index
    %c0_4 = arith.constant 0 : index
    %2 = vector.load %arg2[%c0_3, %c0_4] : memref<32x20xf32, #tpu.memory_space<vmem>>, vector<32x20xf32>
    %c0_5 = arith.constant 0 : index
    %c0_6 = arith.constant 0 : index
    %3 = vector.load %arg1[%c0_5, %c0_6] : memref<20x128xf32, #tpu.memory_space<vmem>>, vector<20x128xf32>
    %cst = arith.constant dense<0.000000e+00> : vector<32x128xf32>
    %4 = tpu.matmul %2, %3, %cst {dimension_numbers = #tpu.dot_dimension_numbers<[1], [0], [0], [1], [0, 0, 1, 1], [], []>} : vector<32x20xf32>, vector<20x128xf32>, vector<32x128xf32> -> vector<32x128xf32>
    %5 = vector.extract_strided_slice %0 {offsets = [0, 0], sizes = [32, 1], strides = [1, 1]} : vector<32x9xf32> to vector<32x1xf32>
    %6 = vector.broadcast %5 : vector<32x1xf32> to vector<32x128xf32>
    %7 = arith.addf %4, %6 : vector<32x128xf32>
    %8 = vector.extract_strided_slice %0 {offsets = [0, 1], sizes = [32, 1], strides = [1, 1]} : vector<32x9xf32> to vector<32x1xf32>
    %9 = vector.extract_strided_slice %0 {offsets = [0, 2], sizes = [32, 1], strides = [1, 1]} : vector<32x9xf32> to vector<32x1xf32>
    %cst_7 = arith.constant dense<0.000000e+00> : vector<128xf32>
    %10 = vector.multi_reduction <add>, %7, %cst_7 [0] : vector<32x128xf32> to vector<128xf32>
    %11 = vector.shape_cast %10 : vector<128xf32> to vector<1x128xf32>
    %cst_8 = arith.constant 3.125000e-02 : f32
    %12 = vector.broadcast %cst_8 : f32 to vector<1x128xf32>
    %13 = arith.mulf %11, %12 : vector<1x128xf32>
    %14 = vector.broadcast %13 : vector<1x128xf32> to vector<32x128xf32>
    %15 = arith.subf %7, %14 : vector<32x128xf32>
    %16 = arith.mulf %15, %15 : vector<32x128xf32>
    %cst_9 = arith.constant dense<0.000000e+00> : vector<128xf32>
    %17 = vector.multi_reduction <add>, %16, %cst_9 [0] : vector<32x128xf32> to vector<128xf32>
    %18 = vector.shape_cast %17 : vector<128xf32> to vector<1x128xf32>
    %cst_10 = arith.constant 3.125000e-02 : f32
    %19 = vector.broadcast %cst_10 : f32 to vector<1x128xf32>
    %20 = arith.mulf %18, %19 : vector<1x128xf32>
    %cst_11 = arith.constant 9.99999974E-6 : f32
    %21 = vector.broadcast %cst_11 : f32 to vector<1x128xf32>
    %22 = arith.addf %20, %21 : vector<1x128xf32>
    %23 = math.rsqrt %22 : vector<1x128xf32>
    %24 = vector.broadcast %8 : vector<32x1xf32> to vector<32x128xf32>
    %25 = vector.broadcast %23 : vector<1x128xf32> to vector<32x128xf32>
    %26 = arith.mulf %24, %25 : vector<32x128xf32>
    %27 = arith.mulf %15, %26 : vector<32x128xf32>
    %28 = vector.broadcast %9 : vector<32x1xf32> to vector<32x128xf32>
    %29 = arith.addf %27, %28 : vector<32x128xf32>
    %cst_12 = arith.constant 0.000000e+00 : f32
    %30 = vector.broadcast %cst_12 : f32 to vector<32x128xf32>
    %31 = arith.maximumf %29, %30 : vector<32x128xf32>
    %c0_13 = arith.constant 0 : index
    %c0_14 = arith.constant 0 : index
    %c0_15 = arith.constant 0 : index
    %32 = vector.load %arg3[%c0_13, %c0_14, %c0_15] : memref<2x32x32xf32, #tpu.memory_space<vmem>>, vector<1x32x32xf32>
    %33 = vector.shape_cast %32 : vector<1x32x32xf32> to vector<32x32xf32>
    %cst_16 = arith.constant dense<0.000000e+00> : vector<32x128xf32>
    %34 = tpu.matmul %33, %31, %cst_16 {dimension_numbers = #tpu.dot_dimension_numbers<[1], [0], [0], [1], [0, 0, 1, 1], [], []>} : vector<32x32xf32>, vector<32x128xf32>, vector<32x128xf32> -> vector<32x128xf32>
    %35 = vector.extract_strided_slice %0 {offsets = [0, 3], sizes = [32, 1], strides = [1, 1]} : vector<32x9xf32> to vector<32x1xf32>
    %36 = vector.broadcast %35 : vector<32x1xf32> to vector<32x128xf32>
    %37 = arith.addf %34, %36 : vector<32x128xf32>
    %38 = vector.extract_strided_slice %0 {offsets = [0, 4], sizes = [32, 1], strides = [1, 1]} : vector<32x9xf32> to vector<32x1xf32>
    %39 = vector.extract_strided_slice %0 {offsets = [0, 5], sizes = [32, 1], strides = [1, 1]} : vector<32x9xf32> to vector<32x1xf32>
    %cst_17 = arith.constant dense<0.000000e+00> : vector<128xf32>
    %40 = vector.multi_reduction <add>, %37, %cst_17 [0] : vector<32x128xf32> to vector<128xf32>
    %41 = vector.shape_cast %40 : vector<128xf32> to vector<1x128xf32>
    %cst_18 = arith.constant 3.125000e-02 : f32
    %42 = vector.broadcast %cst_18 : f32 to vector<1x128xf32>
    %43 = arith.mulf %41, %42 : vector<1x128xf32>
    %44 = vector.broadcast %43 : vector<1x128xf32> to vector<32x128xf32>
    %45 = arith.subf %37, %44 : vector<32x128xf32>
    %46 = arith.mulf %45, %45 : vector<32x128xf32>
    %cst_19 = arith.constant dense<0.000000e+00> : vector<128xf32>
    %47 = vector.multi_reduction <add>, %46, %cst_19 [0] : vector<32x128xf32> to vector<128xf32>
    %48 = vector.shape_cast %47 : vector<128xf32> to vector<1x128xf32>
    %cst_20 = arith.constant 3.125000e-02 : f32
    %49 = vector.broadcast %cst_20 : f32 to vector<1x128xf32>
    %50 = arith.mulf %48, %49 : vector<1x128xf32>
    %cst_21 = arith.constant 9.99999974E-6 : f32
    %51 = vector.broadcast %cst_21 : f32 to vector<1x128xf32>
    %52 = arith.addf %50, %51 : vector<1x128xf32>
    %53 = math.rsqrt %52 : vector<1x128xf32>
    %54 = vector.broadcast %38 : vector<32x1xf32> to vector<32x128xf32>
    %55 = vector.broadcast %53 : vector<1x128xf32> to vector<32x128xf32>
    %56 = arith.mulf %54, %55 : vector<32x128xf32>
    %57 = arith.mulf %45, %56 : vector<32x128xf32>
    %58 = vector.broadcast %39 : vector<32x1xf32> to vector<32x128xf32>
    %59 = arith.addf %57, %58 : vector<32x128xf32>
    %cst_22 = arith.constant 0.000000e+00 : f32
    %60 = vector.broadcast %cst_22 : f32 to vector<32x128xf32>
    %61 = arith.maximumf %59, %60 : vector<32x128xf32>
    %c1 = arith.constant 1 : index
    %c0_23 = arith.constant 0 : index
    %c0_24 = arith.constant 0 : index
    %62 = vector.load %arg3[%c1, %c0_23, %c0_24] : memref<2x32x32xf32, #tpu.memory_space<vmem>>, vector<1x32x32xf32>
    %63 = vector.shape_cast %62 : vector<1x32x32xf32> to vector<32x32xf32>
    %cst_25 = arith.constant dense<0.000000e+00> : vector<32x128xf32>
    %64 = tpu.matmul %63, %61, %cst_25 {dimension_numbers = #tpu.dot_dimension_numbers<[1], [0], [0], [1], [0, 0, 1, 1], [], []>} : vector<32x32xf32>, vector<32x128xf32>, vector<32x128xf32> -> vector<32x128xf32>
    %65 = vector.extract_strided_slice %0 {offsets = [0, 6], sizes = [32, 1], strides = [1, 1]} : vector<32x9xf32> to vector<32x1xf32>
    %66 = vector.broadcast %65 : vector<32x1xf32> to vector<32x128xf32>
    %67 = arith.addf %64, %66 : vector<32x128xf32>
    %68 = vector.extract_strided_slice %0 {offsets = [0, 7], sizes = [32, 1], strides = [1, 1]} : vector<32x9xf32> to vector<32x1xf32>
    %69 = vector.extract_strided_slice %0 {offsets = [0, 8], sizes = [32, 1], strides = [1, 1]} : vector<32x9xf32> to vector<32x1xf32>
    %cst_26 = arith.constant dense<0.000000e+00> : vector<128xf32>
    %70 = vector.multi_reduction <add>, %67, %cst_26 [0] : vector<32x128xf32> to vector<128xf32>
    %71 = vector.shape_cast %70 : vector<128xf32> to vector<1x128xf32>
    %cst_27 = arith.constant 3.125000e-02 : f32
    %72 = vector.broadcast %cst_27 : f32 to vector<1x128xf32>
    %73 = arith.mulf %71, %72 : vector<1x128xf32>
    %74 = vector.broadcast %73 : vector<1x128xf32> to vector<32x128xf32>
    %75 = arith.subf %67, %74 : vector<32x128xf32>
    %76 = arith.mulf %75, %75 : vector<32x128xf32>
    %cst_28 = arith.constant dense<0.000000e+00> : vector<128xf32>
    %77 = vector.multi_reduction <add>, %76, %cst_28 [0] : vector<32x128xf32> to vector<128xf32>
    %78 = vector.shape_cast %77 : vector<128xf32> to vector<1x128xf32>
    %cst_29 = arith.constant 3.125000e-02 : f32
    %79 = vector.broadcast %cst_29 : f32 to vector<1x128xf32>
    %80 = arith.mulf %78, %79 : vector<1x128xf32>
    %cst_30 = arith.constant 9.99999974E-6 : f32
    %81 = vector.broadcast %cst_30 : f32 to vector<1x128xf32>
    %82 = arith.addf %80, %81 : vector<1x128xf32>
    %83 = math.rsqrt %82 : vector<1x128xf32>
    %84 = vector.broadcast %68 : vector<32x1xf32> to vector<32x128xf32>
    %85 = vector.broadcast %83 : vector<1x128xf32> to vector<32x128xf32>
    %86 = arith.mulf %84, %85 : vector<32x128xf32>
    %87 = arith.mulf %75, %86 : vector<32x128xf32>
    %88 = vector.broadcast %69 : vector<32x1xf32> to vector<32x128xf32>
    %89 = arith.addf %87, %88 : vector<32x128xf32>
    %cst_31 = arith.constant 0.000000e+00 : f32
    %90 = vector.broadcast %cst_31 : f32 to vector<32x128xf32>
    %91 = arith.maximumf %89, %90 : vector<32x128xf32>
    %c0_32 = arith.constant 0 : index
    %c0_33 = arith.constant 0 : index
    %92 = vector.load %arg4[%c0_32, %c0_33] : memref<13x32xf32, #tpu.memory_space<vmem>>, vector<13x32xf32>
    %cst_34 = arith.constant dense<0.000000e+00> : vector<13x128xf32>
    %93 = tpu.matmul %92, %91, %cst_34 {dimension_numbers = #tpu.dot_dimension_numbers<[1], [0], [0], [1], [0, 0, 1, 1], [], []>} : vector<13x32xf32>, vector<32x128xf32>, vector<13x128xf32> -> vector<13x128xf32>
    %94 = vector.extract_strided_slice %1 {offsets = [0, 0], sizes = [13, 1], strides = [1, 1]} : vector<13x3xf32> to vector<13x1xf32>
    %95 = vector.broadcast %94 : vector<13x1xf32> to vector<13x128xf32>
    %96 = arith.addf %93, %95 : vector<13x128xf32>
    %97 = vector.extract_strided_slice %1 {offsets = [0, 1], sizes = [13, 1], strides = [1, 1]} : vector<13x3xf32> to vector<13x1xf32>
    %98 = vector.extract_strided_slice %1 {offsets = [0, 2], sizes = [13, 1], strides = [1, 1]} : vector<13x3xf32> to vector<13x1xf32>
    %cst_35 = arith.constant dense<0.000000e+00> : vector<128xf32>
    %99 = vector.multi_reduction <add>, %96, %cst_35 [0] : vector<13x128xf32> to vector<128xf32>
    %100 = vector.shape_cast %99 : vector<128xf32> to vector<1x128xf32>
    %cst_36 = arith.constant 0.0769230798 : f32
    %101 = vector.broadcast %cst_36 : f32 to vector<1x128xf32>
    %102 = arith.mulf %100, %101 : vector<1x128xf32>
    %103 = vector.broadcast %102 : vector<1x128xf32> to vector<13x128xf32>
    %104 = arith.subf %96, %103 : vector<13x128xf32>
    %105 = arith.mulf %104, %104 : vector<13x128xf32>
    %cst_37 = arith.constant dense<0.000000e+00> : vector<128xf32>
    %106 = vector.multi_reduction <add>, %105, %cst_37 [0] : vector<13x128xf32> to vector<128xf32>
    %107 = vector.shape_cast %106 : vector<128xf32> to vector<1x128xf32>
    %cst_38 = arith.constant 0.0769230798 : f32
    %108 = vector.broadcast %cst_38 : f32 to vector<1x128xf32>
    %109 = arith.mulf %107, %108 : vector<1x128xf32>
    %cst_39 = arith.constant 9.99999974E-6 : f32
    %110 = vector.broadcast %cst_39 : f32 to vector<1x128xf32>
    %111 = arith.addf %109, %110 : vector<1x128xf32>
    %112 = math.rsqrt %111 : vector<1x128xf32>
    %113 = vector.broadcast %97 : vector<13x1xf32> to vector<13x128xf32>
    %114 = vector.broadcast %112 : vector<1x128xf32> to vector<13x128xf32>
    %115 = arith.mulf %113, %114 : vector<13x128xf32>
    %116 = arith.mulf %104, %115 : vector<13x128xf32>
    %117 = vector.broadcast %98 : vector<13x1xf32> to vector<13x128xf32>
    %118 = arith.addf %116, %117 : vector<13x128xf32>
    %119 = tpu.iota {dimensions = array<i32: 0>} : vector<13x1xi32>
    %c0_i32 = arith.constant 0 : i32
    %120 = vector.broadcast %c0_i32 : i32 to vector<13x1xi32>
    %121 = arith.cmpi sge, %119, %120 : vector<13x1xi32>
    %c2_i32 = arith.constant 2 : i32
    %122 = vector.broadcast %c2_i32 : i32 to vector<13x1xi32>
    %123 = arith.cmpi slt, %119, %122 : vector<13x1xi32>
    %124 = arith.andi %121, %123 : vector<13x1xi1>
    %c2_i32_40 = arith.constant 2 : i32
    %125 = vector.broadcast %c2_i32_40 : i32 to vector<13x1xi32>
    %126 = arith.cmpi sge, %119, %125 : vector<13x1xi32>
    %c6_i32 = arith.constant 6 : i32
    %127 = vector.broadcast %c6_i32 : i32 to vector<13x1xi32>
    %128 = arith.cmpi slt, %119, %127 : vector<13x1xi32>
    %129 = arith.andi %126, %128 : vector<13x1xi1>
    %c7_i32 = arith.constant 7 : i32
    %130 = vector.broadcast %c7_i32 : i32 to vector<13x1xi32>
    %131 = arith.cmpi sge, %119, %130 : vector<13x1xi32>
    %c10_i32 = arith.constant 10 : i32
    %132 = vector.broadcast %c10_i32 : i32 to vector<13x1xi32>
    %133 = arith.cmpi slt, %119, %132 : vector<13x1xi32>
    %134 = arith.andi %131, %133 : vector<13x1xi1>
    %c12_i32 = arith.constant 12 : i32
    %135 = vector.broadcast %c12_i32 : i32 to vector<13x1xi32>
    %136 = arith.cmpi sge, %119, %135 : vector<13x1xi32>
    %c13_i32 = arith.constant 13 : i32
    %137 = vector.broadcast %c13_i32 : i32 to vector<13x1xi32>
    %138 = arith.cmpi slt, %119, %137 : vector<13x1xi32>
    %139 = arith.andi %136, %138 : vector<13x1xi1>
    %140 = arith.ori %124, %139 : vector<13x1xi1>
    %cst_41 = arith.constant 5.000000e-01 : f32
    %141 = vector.broadcast %cst_41 : f32 to vector<13x128xf32>
    %142 = arith.mulf %141, %118 : vector<13x128xf32>
    %143 = vector.shape_cast %140 : vector<13x1xi1> to vector<13x1xi1>
    %144 = vector.broadcast %143 : vector<13x1xi1> to vector<13x128xi1>
    %145 = arith.select %144, %142, %118 : vector<13x128xi1>, vector<13x128xf32>
    %146 = math.tanh %145 : vector<13x128xf32>
    %cst_42 = arith.constant 5.000000e-01 : f32
    %147 = vector.broadcast %cst_42 : f32 to vector<13x128xf32>
    %148 = arith.mulf %147, %146 : vector<13x128xf32>
    %cst_43 = arith.constant 5.000000e-01 : f32
    %149 = vector.broadcast %cst_43 : f32 to vector<13x128xf32>
    %150 = arith.addf %148, %149 : vector<13x128xf32>
    %151 = vector.shape_cast %140 : vector<13x1xi1> to vector<13x1xi1>
    %152 = vector.broadcast %151 : vector<13x1xi1> to vector<13x128xi1>
    %153 = arith.select %152, %150, %146 : vector<13x128xi1>, vector<13x128xf32>
    %cst_44 = arith.constant -1.000000e+30 : f32
    %154 = vector.shape_cast %129 : vector<13x1xi1> to vector<13x1xi1>
    %155 = vector.broadcast %154 : vector<13x1xi1> to vector<13x128xi1>
    %156 = vector.broadcast %cst_44 : f32 to vector<13x128xf32>
    %157 = arith.select %155, %118, %156 : vector<13x128xi1>, vector<13x128xf32>
    %cst_45 = arith.constant dense<0xFF800000> : vector<128xf32>
    %158 = vector.multi_reduction <maximumf>, %157, %cst_45 [0] : vector<13x128xf32> to vector<128xf32>
    %159 = vector.shape_cast %158 : vector<128xf32> to vector<1x128xf32>
    %160 = vector.shape_cast %129 : vector<13x1xi1> to vector<13x1xi1>
    %161 = vector.broadcast %160 : vector<13x1xi1> to vector<13x128xi1>
    %162 = vector.shape_cast %159 : vector<1x128xf32> to vector<1x128xf32>
    %163 = vector.broadcast %162 : vector<1x128xf32> to vector<13x128xf32>
    %164 = arith.select %161, %163, %118 : vector<13x128xi1>, vector<13x128xf32>
    %cst_46 = arith.constant -1.000000e+30 : f32
    %165 = vector.shape_cast %134 : vector<13x1xi1> to vector<13x1xi1>
    %166 = vector.broadcast %165 : vector<13x1xi1> to vector<13x128xi1>
    %167 = vector.broadcast %cst_46 : f32 to vector<13x128xf32>
    %168 = arith.select %166, %118, %167 : vector<13x128xi1>, vector<13x128xf32>
    %cst_47 = arith.constant dense<0xFF800000> : vector<128xf32>
    %169 = vector.multi_reduction <maximumf>, %168, %cst_47 [0] : vector<13x128xf32> to vector<128xf32>
    %170 = vector.shape_cast %169 : vector<128xf32> to vector<1x128xf32>
    %171 = vector.shape_cast %134 : vector<13x1xi1> to vector<13x1xi1>
    %172 = vector.broadcast %171 : vector<13x1xi1> to vector<13x128xi1>
    %173 = vector.shape_cast %170 : vector<1x128xf32> to vector<1x128xf32>
    %174 = vector.broadcast %173 : vector<1x128xf32> to vector<13x128xf32>
    %175 = arith.select %172, %174, %164 : vector<13x128xi1>, vector<13x128xf32>
    %176 = arith.subf %118, %175 : vector<13x128xf32>
    %177 = math.exp %176 : vector<13x128xf32>
    %cst_48 = arith.constant 0.000000e+00 : f32
    %178 = vector.shape_cast %129 : vector<13x1xi1> to vector<13x1xi1>
    %179 = vector.broadcast %178 : vector<13x1xi1> to vector<13x128xi1>
    %180 = vector.broadcast %cst_48 : f32 to vector<13x128xf32>
    %181 = arith.select %179, %177, %180 : vector<13x128xi1>, vector<13x128xf32>
    %cst_49 = arith.constant dense<0.000000e+00> : vector<128xf32>
    %182 = vector.multi_reduction <add>, %181, %cst_49 [0] : vector<13x128xf32> to vector<128xf32>
    %183 = vector.shape_cast %182 : vector<128xf32> to vector<1x128xf32>
    %184 = tpu.reciprocal %183 {approx = true} : vector<1x128xf32> -> vector<1x128xf32>
    %185 = arith.mulf %183, %184 : vector<1x128xf32>
    %cst_50 = arith.constant 2.000000e+00 : f32
    %186 = vector.broadcast %cst_50 : f32 to vector<1x128xf32>
    %187 = arith.subf %186, %185 : vector<1x128xf32>
    %188 = arith.mulf %184, %187 : vector<1x128xf32>
    %189 = vector.broadcast %188 : vector<1x128xf32> to vector<13x128xf32>
    %190 = arith.mulf %181, %189 : vector<13x128xf32>
    %cst_51 = arith.constant 0.000000e+00 : f32
    %191 = vector.shape_cast %134 : vector<13x1xi1> to vector<13x1xi1>
    %192 = vector.broadcast %191 : vector<13x1xi1> to vector<13x128xi1>
    %193 = vector.broadcast %cst_51 : f32 to vector<13x128xf32>
    %194 = arith.select %192, %177, %193 : vector<13x128xi1>, vector<13x128xf32>
    %cst_52 = arith.constant dense<0.000000e+00> : vector<128xf32>
    %195 = vector.multi_reduction <add>, %194, %cst_52 [0] : vector<13x128xf32> to vector<128xf32>
    %196 = vector.shape_cast %195 : vector<128xf32> to vector<1x128xf32>
    %197 = tpu.reciprocal %196 {approx = true} : vector<1x128xf32> -> vector<1x128xf32>
    %198 = arith.mulf %196, %197 : vector<1x128xf32>
    %cst_53 = arith.constant 2.000000e+00 : f32
    %199 = vector.broadcast %cst_53 : f32 to vector<1x128xf32>
    %200 = arith.subf %199, %198 : vector<1x128xf32>
    %201 = arith.mulf %197, %200 : vector<1x128xf32>
    %202 = vector.broadcast %201 : vector<1x128xf32> to vector<13x128xf32>
    %203 = arith.mulf %194, %202 : vector<13x128xf32>
    %204 = arith.addf %190, %203 : vector<13x128xf32>
    %205 = arith.ori %129, %134 : vector<13x1xi1>
    %206 = vector.shape_cast %205 : vector<13x1xi1> to vector<13x1xi1>
    %207 = vector.broadcast %206 : vector<13x1xi1> to vector<13x128xi1>
    %208 = arith.select %207, %204, %153 : vector<13x128xi1>, vector<13x128xf32>
    %c0_54 = arith.constant 0 : index
    %c0_55 = arith.constant 0 : index
    %209 = vector.load %arg7[%c0_54, %c0_55] : memref<13x128xf32, #tpu.memory_space<vmem>>, vector<13x128xf32>
    tpu.vector_store %arg7[%c0_54, %c0_55], %208 {strides = array<i32>} : memref<13x128xf32, #tpu.memory_space<vmem>>, vector<13x128xf32>,
    return
  }
  func.func @transform_0(%arg0: i32) -> (i32, i32) {
    %c0_i32 = arith.constant 0 : i32
    %c0_i32_0 = arith.constant 0 : i32
    return %c0_i32, %arg0 : i32, i32
  }
  func.func @transform_1(%arg0: i32) -> (i32, i32) {
    %c0_i32 = arith.constant 0 : i32
    %c0_i32_0 = arith.constant 0 : i32
    %c0_i32_1 = arith.constant 0 : i32
    return %c0_i32, %c0_i32_0 : i32, i32
  }
  func.func @transform_2(%arg0: i32) -> (i32, i32, i32) {
    %c0_i32 = arith.constant 0 : i32
    %c0_i32_0 = arith.constant 0 : i32
    %c0_i32_1 = arith.constant 0 : i32
    %c0_i32_2 = arith.constant 0 : i32
    return %c0_i32, %c0_i32_0, %c0_i32_1 : i32, i32, i32
  }
  func.func @transform_3(%arg0: i32) -> (i32, i32) {
    %c0_i32 = arith.constant 0 : i32
    %c0_i32_0 = arith.constant 0 : i32
    %c0_i32_1 = arith.constant 0 : i32
    return %c0_i32, %c0_i32_0 : i32, i32
  }
  func.func @transform_4(%arg0: i32) -> (i32, i32) {
    %c0_i32 = arith.constant 0 : i32
    %c0_i32_0 = arith.constant 0 : i32
    %c0_i32_1 = arith.constant 0 : i32
    return %c0_i32, %c0_i32_0 : i32, i32
  }
  func.func @transform_5(%arg0: i32) -> (i32, i32) {
    %c0_i32 = arith.constant 0 : i32
    %c0_i32_0 = arith.constant 0 : i32
    %c0_i32_1 = arith.constant 0 : i32
    return %c0_i32, %c0_i32_0 : i32, i32
  }
  func.func @transform_6(%arg0: i32) -> (i32, i32) {
    %c0_i32 = arith.constant 0 : i32
    %c0_i32_0 = arith.constant 0 : i32
    return %c0_i32, %arg0 : i32, i32
  }
}

</mosaic_0001>

<llo_original>
// kernel: vgan_generator_forward.1
$region0: #{vgan_generator_forward.1}
  #allocation0 [shape = 'u32[]', space=smem, size = 0x4, offset = 0x4, fixed_abs, tag = 'smem constant byte address 0x4 - core index']
  #allocation1 [shape = 'u32[144,128]{1,0:T(1,128)}', space=vmem, size = 0x12000, scoped, tag = 'internal scratch']
  %s0 = inlined_call_operand.vmem [shape: f32[20,128], index: 0, kind: input, shape index: {}]
  %s1 = inlined_call_operand.vmem [shape: f32[32,20], index: 1, kind: input, shape index: {}]
  %s2 = inlined_call_operand.vmem [shape: f32[2,32,32], index: 2, kind: input, shape index: {}]
  %s3 = inlined_call_operand.vmem [shape: f32[13,32], index: 3, kind: input, shape index: {}]
  %s4 = inlined_call_operand.vmem [shape: f32[32,9], index: 4, kind: input, shape index: {}]
  %s5 = inlined_call_operand.vmem [shape: f32[13,3], index: 5, kind: input, shape index: {}]
  %s6 = inlined_call_operand.vmem [shape: f32[13,128], index: 6, kind: output, shape index: {}]
  %s7 = sld [smem:[#allocation0]]
  $region34: #{vgan_generator_forward.1} parent=0
    _
  %s9 = ssub.s32 1, %s7
  %s10 = scalar_select 0, %s9, %s7
  // Predicated region
  $region2: #{vgan_generator_forward.1} parent=0 // pred_check
    _
  $region3: #{vgan_generator_forward.1} parent=0 // pred_check_branch
    %12 = sbr.rel (0) target = $region5
  $region4: #{vgan_generator_forward.1} parent=0 // pred_region
    _
  $region5: #{vgan_generator_forward.1} parent=0 // pred_fallthru
    _
  // Predicated region
  $region6: #{vgan_generator_forward.1} parent=0 // pred_check
    _
  $region7: #{vgan_generator_forward.1} parent=0 // pred_check_branch
    %14 = sbr.rel (0) target = $region9
  $region8: #{vgan_generator_forward.1} parent=0 // pred_region
    _
  $region9: #{vgan_generator_forward.1} parent=0 // pred_fallthru
    _
  // Predicated region
  $region10: #{vgan_generator_forward.1} parent=0 // pred_check
    _
  $region11: #{vgan_generator_forward.1} parent=0 // pred_check_branch
    %16 = sbr.rel (0) target = $region13
  $region12: #{vgan_generator_forward.1} parent=0 // pred_region
    _
  $region13: #{vgan_generator_forward.1} parent=0 // pred_fallthru
    _
  // Predicated region
  $region14: #{vgan_generator_forward.1} parent=0 // pred_check
    _
  $region15: #{vgan_generator_forward.1} parent=0 // pred_check_branch
    %18 = sbr.rel (0) target = $region17
  $region16: #{vgan_generator_forward.1} parent=0 // pred_region
    _
  $region17: #{vgan_generator_forward.1} parent=0 // pred_fallthru
    _
  // Predicated region
  $region18: #{vgan_generator_forward.1} parent=0 // pred_check
    _
  $region19: #{vgan_generator_forward.1} parent=0 // pred_check_branch
    %20 = sbr.rel (0) target = $region21
  $region20: #{vgan_generator_forward.1} parent=0 // pred_region
    _
  $region21: #{vgan_generator_forward.1} parent=0 // pred_fallthru
    _
  // Predicated region
  $region22: #{vgan_generator_forward.1} parent=0 // pred_check
    _
  $region23: #{vgan_generator_forward.1} parent=0 // pred_check_branch
    %22 = sbr.rel (0) target = $region25
  $region24: #{vgan_generator_forward.1} parent=0 // pred_region
    _
  $region25: #{vgan_generator_forward.1} parent=0 // pred_fallthru
    _
  %v23 = vld [vmem:[%s4] sm:$0xff]
  %v24 = vld [vmem:[%s4 + $0x8] sm:$0xff]
  %v25 = vld [vmem:[%s4 + $0x10] sm:$0xff]
  %v26 = vld [vmem:[%s4 + $0x18] sm:$0xff]
  %v27 = vld [vmem:[%s5] sm:$0xff]
  %v28 = vld [vmem:[%s5 + $0x8] sm:$0x1f]
  %v29 = vld [vmem:[%s1] sm:$0xff]
  %v30 = vld [vmem:[%s1 + $0x8] sm:$0xff]
  %v31 = vld [vmem:[%s1 + $0x10] sm:$0xff]
  %v32 = vld [vmem:[%s1 + $0x18] sm:$0xff]
  %v33 = vld [vmem:[%s0] sm:$0xff]
  %v34 = vld [vmem:[%s0 + $0x8] sm:$0xff]
  %v35 = vld [vmem:[%s0 + $0x10] sm:$0xf]
  %37 = vset.pattern.permute.xlu0 0
  %38 = vperm.xlu0 %37, %v23
  %v39 = vpop.permute.xlu0 %38
  %42 = vset.pattern.permute.xlu0 0
  %43 = vperm.xlu0 %42, %v24
  %v44 = vpop.permute.xlu0 %43
  %47 = vset.pattern.permute.xlu0 0
  %48 = vperm.xlu0 %47, %v25
  %v49 = vpop.permute.xlu0 %48
  %52 = vset.pattern.permute.xlu0 0
  %53 = vperm.xlu0 %52, %v26
  %v54 = vpop.permute.xlu0 %53
  %vm56 = vcmask 162816
  %v58 = vsel %vm56, %v29, 0
  %v61 = vsel %vm56, %v30, 0
  %v64 = vsel %vm56, %v31, 0
  %v67 = vsel %vm56, %v32, 0
  %vm69 = vcmask 1043456
  %v71 = vsel %vm69, %v35, 0
  %73 = vmatprep.subr.mxu0 0.0
  %74 = vmatpush1.msra.mxu0 0.0
  %75 = vmatprep.subr.mxu0 0.0
  %76 = vmatpush1.msra.mxu0 0.0
  %77 = vmatprep.subr.mxu0 0.0
  %78 = vmatpush1.msra.mxu0 0.0
  %79 = vmatprep.subr.mxu0 0.0
  %80 = vmatpush1.msra.mxu0 0.0
  %81 = vmatprep.subr.mxu0 0.0
  %82 = vmatpush1.msra.mxu0 0.0
  %83 = vmatprep.subr.mxu0 0.0
  %84 = vmatpush1.msra.mxu0 0.0
  %85 = vmatprep.subr.mxu0 0.0
  %86 = vmatpush1.msra.mxu0 0.0
  %87 = vmatprep.subr.mxu0 0.0
  %88 = vmatpush1.msra.mxu0 0.0
  %89 = vmatprep.subr.mxu0 0.0
  %90 = vmatpush1.msra.mxu0 0.0
  %91 = vmatprep.subr.mxu0 0.0
  %92 = vmatpush1.msra.mxu0 0.0
  %93 = vmatprep.subr.mxu0 0.0
  %94 = vmatpush1.msra.mxu0 0.0
  %95 = vmatprep.subr.mxu0 0.0
  %96 = vmatpush1.msra.mxu0 0.0
  %97 = vmatprep.subr.mxu0 0.0
  %98 = vmatpush1.msra.mxu0 0.0
  %99 = vmatprep.subr.mxu0 0.0
  %100 = vmatpush1.msra.mxu0 %v71
  %101 = vmatprep.subr.mxu0 0.0
  %102 = vmatpush1.msra.mxu0 %v34
  %103 = vmatprep.subr.mxu0 0.0
  %104 = vmatpush1.msra.mxu0 %v33
  %105 = vmatprep.subr.mxu0 0.0
  %106 = vmatpush2.msra.mxu0 0.0
  %107 = vmatprep.subr.mxu0 0.0
  %108 = vmatpush2.msra.mxu0 0.0
  %109 = vmatprep.subr.mxu0 0.0
  %110 = vmatpush2.msra.mxu0 0.0
  %111 = vmatprep.subr.mxu0 0.0
  %112 = vmatpush2.msra.mxu0 0.0
  %113 = vmatprep.subr.mxu0 0.0
  %114 = vmatpush2.msra.mxu0 0.0
  %115 = vmatprep.subr.mxu0 0.0
  %116 = vmatpush2.msra.mxu0 0.0
  %117 = vmatprep.subr.mxu0 0.0
  %118 = vmatpush2.msra.mxu0 0.0
  %119 = vmatprep.subr.mxu0 0.0
  %120 = vmatpush2.msra.mxu0 0.0
  %121 = vmatprep.subr.mxu0 0.0
  %122 = vmatpush2.msra.mxu0 0.0
  %123 = vmatprep.subr.mxu0 0.0
  %124 = vmatpush2.msra.mxu0 0.0
  %125 = vmatprep.subr.mxu0 0.0
  %126 = vmatpush2.msra.mxu0 0.0
  %127 = vmatprep.subr.mxu0 0.0
  %128 = vmatpush2.msra.mxu0 0.0
  %129 = vmatprep.subr.mxu0 0.0
  %130 = vmatpush2.msra.mxu0 0.0
  %131 = vmatprep.subr.mxu0 0.0
  %132 = vmatpush2.msra.mxu0 0.0
  %133 = vmatprep.subr.mxu0 0.0
  %134 = vmatpush2.msra.mxu0 0.0
  %135 = vmatprep.subr.mxu0 0.0
  %136 = vmatpush2.msra.mxu0 0.0
  %137 = vmatprep.mubr.f32.mxu0 0.0
  %138 = vmatmul.mubr.f32.gmra.mxu0 %v58
  %v139 = vpop.f32.mrf.mxu0
  %v140 = vadd.f32 %v39, %v139
  %v141 = vpop.f32.mrf.mxu0
  %142 = vmatprep.mubr.f32.mxu0 0.0
  %143 = vmatmul.mubr.f32.gmra.mxu0 %v61
  %v144 = vpop.f32.mrf.mxu0
  %v145 = vadd.f32 %v44, %v144
  %v146 = vpop.f32.mrf.mxu0
  %147 = vmatprep.mubr.f32.mxu0 0.0
  %148 = vmatmul.mubr.f32.gmra.mxu0 %v64
  %v149 = vpop.f32.mrf.mxu0
  %v150 = vadd.f32 %v49, %v149
  %v151 = vpop.f32.mrf.mxu0
  %152 = vmatprep.mubr.f32.mxu0 0.0
  %153 = vmatmul.mubr.f32.gmra.mxu0 %v67
  %v154 = vpop.f32.mrf.mxu0
  %v155 = vadd.f32 %v54, %v154
  %v156 = vpop.f32.mrf.mxu0
  %157 = vdwg.mxu0
  %v158 = vadd.f32 %v140, %v145
  %v159 = vadd.f32 %v158, %v150
  %v160 = vadd.f32 %v159, %v155
  %v161 = vrot.slane %v160, 4
  %v162 = vadd.f32 %v160, %v161
  %v163 = vrot.slane %v162, 2
  %v164 = vadd.f32 %v162, %v163
  %v165 = vrot.slane %v164, 1
  %v166 = vadd.f32 %v164, %v165
  %v167 = vmul.f32 %v166, 0.03125
  %v168 = vsub.f32 %v140, %v167
  %v169 = vsub.f32 %v145, %v167
  %v170 = vsub.f32 %v150, %v167
  %v171 = vsub.f32 %v155, %v167
  %v172 = vmul.f32 %v168, %v168
  %v173 = vmul.f32 %v169, %v169
  %v174 = vmul.f32 %v170, %v170
  %v175 = vmul.f32 %v171, %v171
  %v176 = vadd.f32 %v172, %v173
  %v177 = vadd.f32 %v176, %v174
  %v178 = vadd.f32 %v177, %v175
  %v179 = vrot.slane %v178, 4
  %v180 = vadd.f32 %v178, %v179
  %v181 = vrot.slane %v180, 2
  %v182 = vadd.f32 %v180, %v181
  %v183 = vrot.slane %v182, 1
  %v184 = vadd.f32 %v182, %v183
  %v185 = vmul.f32 %v184, 0.03125
  %v186 = vadd.f32 %v185, 1e-05
  %v187 = vrsqrt.pop %v186
  %188 = vset.pattern.permute.xlu0 1
  %189 = vperm.xlu0 %188, %v23
  %v190 = vpop.permute.xlu0 %189
  %192 = vset.pattern.permute.xlu0 1
  %193 = vperm.xlu0 %192, %v24
  %v194 = vpop.permute.xlu0 %193
  %196 = vset.pattern.permute.xlu0 1
  %197 = vperm.xlu0 %196, %v25
  %v198 = vpop.permute.xlu0 %197
  %200 = vset.pattern.permute.xlu0 1
  %201 = vperm.xlu0 %200, %v26
  %v202 = vpop.permute.xlu0 %201
  %v204 = vmul.f32 %v190, %v187
  %v205 = vmul.f32 %v194, %v187
  %v206 = vmul.f32 %v198, %v187
  %v207 = vmul.f32 %v202, %v187
  %v208 = vmul.f32 %v168, %v204
  %v209 = vmul.f32 %v169, %v205
  %v210 = vmul.f32 %v170, %v206
  %v211 = vmul.f32 %v171, %v207
  %212 = vset.pattern.permute.xlu0 2
  %213 = vperm.xlu0 %212, %v23
  %v214 = vpop.permute.xlu0 %213
  %216 = vset.pattern.permute.xlu0 2
  %217 = vperm.xlu0 %216, %v24
  %v218 = vpop.permute.xlu0 %217
  %220 = vset.pattern.permute.xlu0 2
  %221 = vperm.xlu0 %220, %v25
  %v222 = vpop.permute.xlu0 %221
  %224 = vset.pattern.permute.xlu0 2
  %225 = vperm.xlu0 %224, %v26
  %v226 = vpop.permute.xlu0 %225
  %v228 = vadd.f32 %v208, %v214
  %v229 = vadd.f32 %v209, %v218
  %v230 = vadd.f32 %v210, %v222
  %v231 = vadd.f32 %v211, %v226
  %v232 = vmax.f32 %v228, 0.0
  %v233 = vmax.f32 %v229, 0.0
  %v234 = vmax.f32 %v230, 0.0
  %v235 = vmax.f32 %v231, 0.0
  %v236 = vld [vmem:[%s2] sm:$0xff]
  %v237 = vld [vmem:[%s2 + $0x8] sm:$0xff]
  %v238 = vld [vmem:[%s2 + $0x10] sm:$0xff]
  %v239 = vld [vmem:[%s2 + $0x18] sm:$0xff]
  %240 = vset.pattern.permute.xlu0 3
  %241 = vperm.xlu0 %240, %v23
  %v242 = vpop.permute.xlu0 %241
  %244 = vset.pattern.permute.xlu0 3
  %245 = vperm.xlu0 %244, %v24
  %v246 = vpop.permute.xlu0 %245
  %248 = vset.pattern.permute.xlu0 3
  %249 = vperm.xlu0 %248, %v25
  %v250 = vpop.permute.xlu0 %249
  %252 = vset.pattern.permute.xlu0 3
  %253 = vperm.xlu0 %252, %v26
  %v254 = vpop.permute.xlu0 %253
  %vm256 = vcmask 261120
  %v258 = vsel %vm256, %v236, 0
  %v261 = vsel %vm256, %v237, 0
  %v264 = vsel %vm256, %v238, 0
  %v267 = vsel %vm256, %v239, 0
  %269 = vmatprep.subr.mxu0 0.0
  %270 = vmatpush1.msra.mxu0 0.0
  %271 = vmatprep.subr.mxu0 0.0
  %272 = vmatpush1.msra.mxu0 0.0
  %273 = vmatprep.subr.mxu0 0.0
  %274 = vmatpush1.msra.mxu0 0.0
  %275 = vmatprep.subr.mxu0 0.0
  %276 = vmatpush1.msra.mxu0 0.0
  %277 = vmatprep.subr.mxu0 0.0
  %278 = vmatpush1.msra.mxu0 0.0
  %279 = vmatprep.subr.mxu0 0.0
  %280 = vmatpush1.msra.mxu0 0.0
  %281 = vmatprep.subr.mxu0 0.0
  %282 = vmatpush1.msra.mxu0 0.0
  %283 = vmatprep.subr.mxu0 0.0
  %284 = vmatpush1.msra.mxu0 0.0
  %285 = vmatprep.subr.mxu0 0.0
  %286 = vmatpush1.msra.mxu0 0.0
  %287 = vmatprep.subr.mxu0 0.0
  %288 = vmatpush1.msra.mxu0 0.0
  %289 = vmatprep.subr.mxu0 0.0
  %290 = vmatpush1.msra.mxu0 0.0
  %291 = vmatprep.subr.mxu0 0.0
  %292 = vmatpush1.msra.mxu0 0.0
  %293 = vmatprep.subr.mxu0 0.0
  %294 = vmatpush1.msra.mxu0 %v235
  %295 = vmatprep.subr.mxu0 0.0
  %296 = vmatpush1.msra.mxu0 %v234
  %297 = vmatprep.subr.mxu0 0.0
  %298 = vmatpush1.msra.mxu0 %v233
  %299 = vmatprep.subr.mxu0 0.0
  %300 = vmatpush1.msra.mxu0 %v232
  %301 = vmatprep.subr.mxu0 0.0
  %302 = vmatpush2.msra.mxu0 0.0
  %303 = vmatprep.subr.mxu0 0.0
  %304 = vmatpush2.msra.mxu0 0.0
  %305 = vmatprep.subr.mxu0 0.0
  %306 = vmatpush2.msra.mxu0 0.0
  %307 = vmatprep.subr.mxu0 0.0
  %308 = vmatpush2.msra.mxu0 0.0
  %309 = vmatprep.subr.mxu0 0.0
  %310 = vmatpush2.msra.mxu0 0.0
  %311 = vmatprep.subr.mxu0 0.0
  %312 = vmatpush2.msra.mxu0 0.0
  %313 = vmatprep.subr.mxu0 0.0
  %314 = vmatpush2.msra.mxu0 0.0
  %315 = vmatprep.subr.mxu0 0.0
  %316 = vmatpush2.msra.mxu0 0.0
  %317 = vmatprep.subr.mxu0 0.0
  %318 = vmatpush2.msra.mxu0 0.0
  %319 = vmatprep.subr.mxu0 0.0
  %320 = vmatpush2.msra.mxu0 0.0
  %321 = vmatprep.subr.mxu0 0.0
  %322 = vmatpush2.msra.mxu0 0.0
  %323 = vmatprep.subr.mxu0 0.0
  %324 = vmatpush2.msra.mxu0 0.0
  %325 = vmatprep.subr.mxu0 0.0
  %326 = vmatpush2.msra.mxu0 0.0
  %327 = vmatprep.subr.mxu0 0.0
  %328 = vmatpush2.msra.mxu0 0.0
  %329 = vmatprep.subr.mxu0 0.0
  %330 = vmatpush2.msra.mxu0 0.0
  %331 = vmatprep.subr.mxu0 0.0
  %332 = vmatpush2.msra.mxu0 0.0
  %333 = vmatprep.mubr.f32.mxu0 0.0
  %334 = vmatmul.mubr.f32.gmra.mxu0 %v258
  %v335 = vpop.f32.mrf.mxu0
  %v336 = vadd.f32 %v242, %v335
  %v337 = vpop.f32.mrf.mxu0
  %338 = vmatprep.mubr.f32.mxu0 0.0
  %339 = vmatmul.mubr.f32.gmra.mxu0 %v261
  %v340 = vpop.f32.mrf.mxu0
  %v341 = vadd.f32 %v246, %v340
  %v342 = vpop.f32.mrf.mxu0
  %343 = vmatprep.mubr.f32.mxu0 0.0
  %344 = vmatmul.mubr.f32.gmra.mxu0 %v264
  %v345 = vpop.f32.mrf.mxu0
  %v346 = vadd.f32 %v250, %v345
  %v347 = vpop.f32.mrf.mxu0
  %348 = vmatprep.mubr.f32.mxu0 0.0
  %349 = vmatmul.mubr.f32.gmra.mxu0 %v267
  %v350 = vpop.f32.mrf.mxu0
  %v351 = vadd.f32 %v254, %v350
  %v352 = vpop.f32.mrf.mxu0
  %353 = vdwg.mxu0
  %v354 = vadd.f32 %v336, %v341
  %v355 = vadd.f32 %v354, %v346
  %v356 = vadd.f32 %v355, %v351
  %v357 = vrot.slane %v356, 4
  %v358 = vadd.f32 %v356, %v357
  %v359 = vrot.slane %v358, 2
  %v360 = vadd.f32 %v358, %v359
  %v361 = vrot.slane %v360, 1
  %v362 = vadd.f32 %v360, %v361
  %v363 = vmul.f32 %v362, 0.03125
  %v364 = vsub.f32 %v336, %v363
  %v365 = vsub.f32 %v341, %v363
  %v366 = vsub.f32 %v346, %v363
  %v367 = vsub.f32 %v351, %v363
  %v368 = vmul.f32 %v364, %v364
  %v369 = vmul.f32 %v365, %v365
  %v370 = vmul.f32 %v366, %v366
  %v371 = vmul.f32 %v367, %v367
  %v372 = vadd.f32 %v368, %v369
  %v373 = vadd.f32 %v372, %v370
  %v374 = vadd.f32 %v373, %v371
  %v375 = vrot.slane %v374, 4
  %v376 = vadd.f32 %v374, %v375
  %v377 = vrot.slane %v376, 2
  %v378 = vadd.f32 %v376, %v377
  %v379 = vrot.slane %v378, 1
  %v380 = vadd.f32 %v378, %v379
  %v381 = vmul.f32 %v380, 0.03125
  %v382 = vadd.f32 %v381, 1e-05
  %v383 = vrsqrt.pop %v382
  %384 = vset.pattern.permute.xlu0 4
  %385 = vperm.xlu0 %384, %v23
  %v386 = vpop.permute.xlu0 %385
  %388 = vset.pattern.permute.xlu0 4
  %389 = vperm.xlu0 %388, %v24
  %v390 = vpop.permute.xlu0 %389
  %392 = vset.pattern.permute.xlu0 4
  %393 = vperm.xlu0 %392, %v25
  %v394 = vpop.permute.xlu0 %393
  %396 = vset.pattern.permute.xlu0 4
  %397 = vperm.xlu0 %396, %v26
  %v398 = vpop.permute.xlu0 %397
  %v400 = vmul.f32 %v386, %v383
  %v401 = vmul.f32 %v390, %v383
  %v402 = vmul.f32 %v394, %v383
  %v403 = vmul.f32 %v398, %v383
  %v404 = vmul.f32 %v364, %v400
  %v405 = vmul.f32 %v365, %v401
  %v406 = vmul.f32 %v366, %v402
  %v407 = vmul.f32 %v367, %v403
  %408 = vset.pattern.permute.xlu0 5
  %409 = vperm.xlu0 %408, %v23
  %v410 = vpop.permute.xlu0 %409
  %412 = vset.pattern.permute.xlu0 5
  %413 = vperm.xlu0 %412, %v24
  %v414 = vpop.permute.xlu0 %413
  %416 = vset.pattern.permute.xlu0 5
  %417 = vperm.xlu0 %416, %v25
  %v418 = vpop.permute.xlu0 %417
  %420 = vset.pattern.permute.xlu0 5
  %421 = vperm.xlu0 %420, %v26
  %v422 = vpop.permute.xlu0 %421
  %v424 = vadd.f32 %v404, %v410
  %v425 = vadd.f32 %v405, %v414
  %v426 = vadd.f32 %v406, %v418
  %v427 = vadd.f32 %v407, %v422
  %v428 = vmax.f32 %v424, 0.0
  %v429 = vmax.f32 %v425, 0.0
  %v430 = vmax.f32 %v426, 0.0
  %v431 = vmax.f32 %v427, 0.0
  %s432 = scalar_lea.vmem %s2, 32
  %v433 = vld [vmem:[%s432] sm:$0xff]
  %v434 = vld [vmem:[%s432 + $0x8] sm:$0xff]
  %v435 = vld [vmem:[%s432 + $0x10] sm:$0xff]
  %v436 = vld [vmem:[%s432 + $0x18] sm:$0xff]
  %437 = vset.pattern.permute.xlu0 6
  %438 = vperm.xlu0 %437, %v23
  %v439 = vpop.permute.xlu0 %438
  %441 = vset.pattern.permute.xlu0 6
  %442 = vperm.xlu0 %441, %v24
  %v443 = vpop.permute.xlu0 %442
  %445 = vset.pattern.permute.xlu0 6
  %446 = vperm.xlu0 %445, %v25
  %v447 = vpop.permute.xlu0 %446
  %449 = vset.pattern.permute.xlu0 6
  %450 = vperm.xlu0 %449, %v26
  %v451 = vpop.permute.xlu0 %450
  %v454 = vsel %vm256, %v433, 0
  %v457 = vsel %vm256, %v434, 0
  %v460 = vsel %vm256, %v435, 0
  %v463 = vsel %vm256, %v436, 0
  %465 = vmatprep.subr.mxu0 0.0
  %466 = vmatpush1.msra.mxu0 0.0
  %467 = vmatprep.subr.mxu0 0.0
  %468 = vmatpush1.msra.mxu0 0.0
  %469 = vmatprep.subr.mxu0 0.0
  %470 = vmatpush1.msra.mxu0 0.0
  %471 = vmatprep.subr.mxu0 0.0
  %472 = vmatpush1.msra.mxu0 0.0
  %473 = vmatprep.subr.mxu0 0.0
  %474 = vmatpush1.msra.mxu0 0.0
  %475 = vmatprep.subr.mxu0 0.0
  %476 = vmatpush1.msra.mxu0 0.0
  %477 = vmatprep.subr.mxu0 0.0
  %478 = vmatpush1.msra.mxu0 0.0
  %479 = vmatprep.subr.mxu0 0.0
  %480 = vmatpush1.msra.mxu0 0.0
  %481 = vmatprep.subr.mxu0 0.0
  %482 = vmatpush1.msra.mxu0 0.0
  %483 = vmatprep.subr.mxu0 0.0
  %484 = vmatpush1.msra.mxu0 0.0
  %485 = vmatprep.subr.mxu0 0.0
  %486 = vmatpush1.msra.mxu0 0.0
  %487 = vmatprep.subr.mxu0 0.0
  %488 = vmatpush1.msra.mxu0 0.0
  %489 = vmatprep.subr.mxu0 0.0
  %490 = vmatpush1.msra.mxu0 %v431
  %491 = vmatprep.subr.mxu0 0.0
  %492 = vmatpush1.msra.mxu0 %v430
  %493 = vmatprep.subr.mxu0 0.0
  %494 = vmatpush1.msra.mxu0 %v429
  %495 = vmatprep.subr.mxu0 0.0
  %496 = vmatpush1.msra.mxu0 %v428
  %497 = vmatprep.subr.mxu0 0.0
  %498 = vmatpush2.msra.mxu0 0.0
  %499 = vmatprep.subr.mxu0 0.0
  %500 = vmatpush2.msra.mxu0 0.0
  %501 = vmatprep.subr.mxu0 0.0
  %502 = vmatpush2.msra.mxu0 0.0
  %503 = vmatprep.subr.mxu0 0.0
  %504 = vmatpush2.msra.mxu0 0.0
  %505 = vmatprep.subr.mxu0 0.0
  %506 = vmatpush2.msra.mxu0 0.0
  %507 = vmatprep.subr.mxu0 0.0
  %508 = vmatpush2.msra.mxu0 0.0
  %509 = vmatprep.subr.mxu0 0.0
  %510 = vmatpush2.msra.mxu0 0.0
  %511 = vmatprep.subr.mxu0 0.0
  %512 = vmatpush2.msra.mxu0 0.0
  %513 = vmatprep.subr.mxu0 0.0
  %514 = vmatpush2.msra.mxu0 0.0
  %515 = vmatprep.subr.mxu0 0.0
  %516 = vmatpush2.msra.mxu0 0.0
  %517 = vmatprep.subr.mxu0 0.0
  %518 = vmatpush2.msra.mxu0 0.0
  %519 = vmatprep.subr.mxu0 0.0
  %520 = vmatpush2.msra.mxu0 0.0
  %521 = vmatprep.subr.mxu0 0.0
  %522 = vmatpush2.msra.mxu0 0.0
  %523 = vmatprep.subr.mxu0 0.0
  %524 = vmatpush2.msra.mxu0 0.0
  %525 = vmatprep.subr.mxu0 0.0
  %526 = vmatpush2.msra.mxu0 0.0
  %527 = vmatprep.subr.mxu0 0.0
  %528 = vmatpush2.msra.mxu0 0.0
  %529 = vmatprep.mubr.f32.mxu0 0.0
  %530 = vmatmul.mubr.f32.gmra.mxu0 %v454
  %v531 = vpop.f32.mrf.mxu0
  %v532 = vadd.f32 %v439, %v531
  %v533 = vpop.f32.mrf.mxu0
  %534 = vmatprep.mubr.f32.mxu0 0.0
  %535 = vmatmul.mubr.f32.gmra.mxu0 %v457
  %v536 = vpop.f32.mrf.mxu0
  %v537 = vadd.f32 %v443, %v536
  %v538 = vpop.f32.mrf.mxu0
  %539 = vmatprep.mubr.f32.mxu0 0.0
  %540 = vmatmul.mubr.f32.gmra.mxu0 %v460
  %v541 = vpop.f32.mrf.mxu0
  %v542 = vadd.f32 %v447, %v541
  %v543 = vpop.f32.mrf.mxu0
  %544 = vmatprep.mubr.f32.mxu0 0.0
  %545 = vmatmul.mubr.f32.gmra.mxu0 %v463
  %v546 = vpop.f32.mrf.mxu0
  %v547 = vadd.f32 %v451, %v546
  %v548 = vpop.f32.mrf.mxu0
  %549 = vdwg.mxu0
  %v550 = vadd.f32 %v532, %v537
  %v551 = vadd.f32 %v550, %v542
  %v552 = vadd.f32 %v551, %v547
  %v553 = vrot.slane %v552, 4
  %v554 = vadd.f32 %v552, %v553
  %v555 = vrot.slane %v554, 2
  %v556 = vadd.f32 %v554, %v555
  %v557 = vrot.slane %v556, 1
  %v558 = vadd.f32 %v556, %v557
  %v559 = vmul.f32 %v558, 0.03125
  %v560 = vsub.f32 %v532, %v559
  %v561 = vsub.f32 %v537, %v559
  %v562 = vsub.f32 %v542, %v559
  %v563 = vsub.f32 %v547, %v559
  %v564 = vmul.f32 %v560, %v560
  %v565 = vmul.f32 %v561, %v561
  %v566 = vmul.f32 %v562, %v562
  %v567 = vmul.f32 %v563, %v563
  %v568 = vadd.f32 %v564, %v565
  %v569 = vadd.f32 %v568, %v566
  %v570 = vadd.f32 %v569, %v567
  %v571 = vrot.slane %v570, 4
  %v572 = vadd.f32 %v570, %v571
  %v573 = vrot.slane %v572, 2
  %v574 = vadd.f32 %v572, %v573
  %v575 = vrot.slane %v574, 1
  %v576 = vadd.f32 %v574, %v575
  %v577 = vmul.f32 %v576, 0.03125
  %v578 = vadd.f32 %v577, 1e-05
  %v579 = vrsqrt.pop %v578
  %580 = vset.pattern.permute.xlu0 7
  %581 = vperm.xlu0 %580, %v23
  %v582 = vpop.permute.xlu0 %581
  %584 = vset.pattern.permute.xlu0 7
  %585 = vperm.xlu0 %584, %v24
  %v586 = vpop.permute.xlu0 %585
  %588 = vset.pattern.permute.xlu0 7
  %589 = vperm.xlu0 %588, %v25
  %v590 = vpop.permute.xlu0 %589
  %592 = vset.pattern.permute.xlu0 7
  %593 = vperm.xlu0 %592, %v26
  %v594 = vpop.permute.xlu0 %593
  %v596 = vmul.f32 %v582, %v579
  %v597 = vmul.f32 %v586, %v579
  %v598 = vmul.f32 %v590, %v579
  %v599 = vmul.f32 %v594, %v579
  %v600 = vmul.f32 %v560, %v596
  %v601 = vmul.f32 %v561, %v597
  %v602 = vmul.f32 %v562, %v598
  %v603 = vmul.f32 %v563, %v599
  %604 = vset.pattern.permute.xlu0 8
  %605 = vperm.xlu0 %604, %v23
  %v606 = vpop.permute.xlu0 %605
  %608 = vset.pattern.permute.xlu0 8
  %609 = vperm.xlu0 %608, %v24
  %v610 = vpop.permute.xlu0 %609
  %612 = vset.pattern.permute.xlu0 8
  %613 = vperm.xlu0 %612, %v25
  %v614 = vpop.permute.xlu0 %613
  %616 = vset.pattern.permute.xlu0 8
  %617 = vperm.xlu0 %616, %v26
  %v618 = vpop.permute.xlu0 %617
  %v620 = vadd.f32 %v600, %v606
  %v621 = vadd.f32 %v601, %v610
  %v622 = vadd.f32 %v602, %v614
  %v623 = vadd.f32 %v603, %v618
  %v624 = vmax.f32 %v620, 0.0
  %v625 = vmax.f32 %v621, 0.0
  %v626 = vmax.f32 %v622, 0.0
  %v627 = vmax.f32 %v623, 0.0
  %v628 = vld [vmem:[%s3] sm:$0xff]
  %v629 = vld [vmem:[%s3 + $0x8] sm:$0x1f]
  %631 = vset.pattern.permute.xlu0 0
  %632 = vperm.xlu0 %631, %v27
  %v633 = vpop.permute.xlu0 %632
  %636 = vset.pattern.permute.xlu0 0
  %637 = vperm.xlu0 %636, %v28
  %v638 = vpop.permute.xlu0 %637
  %v641 = vsel %vm256, %v628, 0
  %v644 = vsel %vm256, %v629, 0
  %646 = vmatprep.subr.mxu0 0.0
  %647 = vmatpush1.msra.mxu0 0.0
  %648 = vmatprep.subr.mxu0 0.0
  %649 = vmatpush1.msra.mxu0 0.0
  %650 = vmatprep.subr.mxu0 0.0
  %651 = vmatpush1.msra.mxu0 0.0
  %652 = vmatprep.subr.mxu0 0.0
  %653 = vmatpush1.msra.mxu0 0.0
  %654 = vmatprep.subr.mxu0 0.0
  %655 = vmatpush1.msra.mxu0 0.0
  %656 = vmatprep.subr.mxu0 0.0
  %657 = vmatpush1.msra.mxu0 0.0
  %658 = vmatprep.subr.mxu0 0.0
  %659 = vmatpush1.msra.mxu0 0.0
  %660 = vmatprep.subr.mxu0 0.0
  %661 = vmatpush1.msra.mxu0 0.0
  %662 = vmatprep.subr.mxu0 0.0
  %663 = vmatpush1.msra.mxu0 0.0
  %664 = vmatprep.subr.mxu0 0.0
  %665 = vmatpush1.msra.mxu0 0.0
  %666 = vmatprep.subr.mxu0 0.0
  %667 = vmatpush1.msra.mxu0 0.0
  %668 = vmatprep.subr.mxu0 0.0
  %669 = vmatpush1.msra.mxu0 0.0
  %670 = vmatprep.subr.mxu0 0.0
  %671 = vmatpush1.msra.mxu0 %v627
  %672 = vmatprep.subr.mxu0 0.0
  %673 = vmatpush1.msra.mxu0 %v626
  %674 = vmatprep.subr.mxu0 0.0
  %675 = vmatpush1.msra.mxu0 %v625
  %676 = vmatprep.subr.mxu0 0.0
  %677 = vmatpush1.msra.mxu0 %v624
  %678 = vmatprep.subr.mxu0 0.0
  %679 = vmatpush2.msra.mxu0 0.0
  %680 = vmatprep.subr.mxu0 0.0
  %681 = vmatpush2.msra.mxu0 0.0
  %682 = vmatprep.subr.mxu0 0.0
  %683 = vmatpush2.msra.mxu0 0.0
  %684 = vmatprep.subr.mxu0 0.0
  %685 = vmatpush2.msra.mxu0 0.0
  %686 = vmatprep.subr.mxu0 0.0
  %687 = vmatpush2.msra.mxu0 0.0
  %688 = vmatprep.subr.mxu0 0.0
  %689 = vmatpush2.msra.mxu0 0.0
  %690 = vmatprep.subr.mxu0 0.0
  %691 = vmatpush2.msra.mxu0 0.0
  %692 = vmatprep.subr.mxu0 0.0
  %693 = vmatpush2.msra.mxu0 0.0
  %694 = vmatprep.subr.mxu0 0.0
  %695 = vmatpush2.msra.mxu0 0.0
  %696 = vmatprep.subr.mxu0 0.0
  %697 = vmatpush2.msra.mxu0 0.0
  %698 = vmatprep.subr.mxu0 0.0
  %699 = vmatpush2.msra.mxu0 0.0
  %700 = vmatprep.subr.mxu0 0.0
  %701 = vmatpush2.msra.mxu0 0.0
  %702 = vmatprep.subr.mxu0 0.0
  %703 = vmatpush2.msra.mxu0 0.0
  %704 = vmatprep.subr.mxu0 0.0
  %705 = vmatpush2.msra.mxu0 0.0
  %706 = vmatprep.subr.mxu0 0.0
  %707 = vmatpush2.msra.mxu0 0.0
  %708 = vmatprep.subr.mxu0 0.0
  %709 = vmatpush2.msra.mxu0 0.0
  %710 = vmatprep.mubr.f32.mxu0 0.0
  %711 = vmatmul.mubr.f32.gmra.mxu0 %v641
  %v712 = vpop.f32.mrf.mxu0
  %v713 = vadd.f32 %v633, %v712
  %v714 = vpop.f32.mrf.mxu0
  %715 = vmatprep.mubr.f32.mxu0 0.0
  %716 = vmatmul.mubr.f32.gmra.mxu0 %v644
  %v717 = vpop.f32.mrf.mxu0
  %v718 = vadd.f32 %v638, %v717
  %v719 = vpop.f32.mrf.mxu0
  %720 = vdwg.mxu0
  %vm721 = vcmask 1044480
  %v722 = vsel %vm721, %v718, 0.0
  %v723 = vadd.f32 %v713, %v722
  %v724 = vrot.slane %v723, 4
  %v725 = vadd.f32 %v723, %v724
  %v726 = vrot.slane %v725, 2
  %v727 = vadd.f32 %v725, %v726
  %v728 = vrot.slane %v727, 1
  %v729 = vadd.f32 %v727, %v728
  %v730 = vmul.f32 %v729, 0.07692308
  %v731 = vsub.f32 %v713, %v730
  %v732 = vsub.f32 %v718, %v730
  %v733 = vmul.f32 %v731, %v731
  %v734 = vmul.f32 %v732, %v732
  %v735 = vsel %vm721, %v734, 0.0
  %v736 = vadd.f32 %v733, %v735
  %v737 = vrot.slane %v736, 4
  %v738 = vadd.f32 %v736, %v737
  %v739 = vrot.slane %v738, 2
  %v740 = vadd.f32 %v738, %v739
  %v741 = vrot.slane %v740, 1
  %v742 = vadd.f32 %v740, %v741
  %v743 = vmul.f32 %v742, 0.07692308
  %v744 = vadd.f32 %v743, 1e-05
  %v745 = vrsqrt.pop %v744
  %746 = vset.pattern.permute.xlu0 1
  %747 = vperm.xlu0 %746, %v27
  %v748 = vpop.permute.xlu0 %747
  %750 = vset.pattern.permute.xlu0 1
  %751 = vperm.xlu0 %750, %v28
  %v752 = vpop.permute.xlu0 %751
  %v754 = vmul.f32 %v748, %v745
  %v755 = vmul.f32 %v752, %v745
  %v756 = vmul.f32 %v731, %v754
  %v757 = vmul.f32 %v732, %v755
  %758 = vset.pattern.permute.xlu0 2
  %759 = vperm.xlu0 %758, %v27
  %v760 = vpop.permute.xlu0 %759
  %762 = vset.pattern.permute.xlu0 2
  %763 = vperm.xlu0 %762, %v28
  %v764 = vpop.permute.xlu0 %763
  %v766 = vadd.f32 %v756, %v760
  %v767 = vadd.f32 %v757, %v764
  %v768 = vlaneseq
  %v769 = vshrl.u32 %v768, 7
  %v770 = vadd.s32 %v769, 8
  %vm771 = vcmp.ge.s32.totalorder %v769, 0
  %vm772 = vcmp.ge.s32.totalorder %v770, 0
  %vm773 = vcmp.lt.s32.totalorder %v769, 2
  %vm774 = vcmp.lt.s32.totalorder %v770, 2
  %vm775 = vmand %vm771, %vm773
  %vm776 = vmand %vm772, %vm774
  %vm777 = vcmp.ge.s32.totalorder %v769, 2
  %vm778 = vcmp.ge.s32.totalorder %v770, 2
  %vm779 = vcmp.lt.s32.totalorder %v769, 6
  %vm780 = vcmp.lt.s32.totalorder %v770, 6
  %vm781 = vmand %vm777, %vm779
  %vm782 = vmand %vm778, %vm780
  %vm783 = vcmp.ge.s32.totalorder %v769, 7
  %vm784 = vcmp.ge.s32.totalorder %v770, 7
  %vm785 = vcmp.lt.s32.totalorder %v769, 10
  %vm786 = vcmp.lt.s32.totalorder %v770, 10
  %vm787 = vmand %vm783, %vm785
  %vm788 = vmand %vm784, %vm786
  %vm789 = vcmp.ge.s32.totalorder %v769, 12
  %vm790 = vcmp.ge.s32.totalorder %v770, 12
  %vm791 = vcmp.lt.s32.totalorder %v769, 13
  %vm792 = vcmp.lt.s32.totalorder %v770, 13
  %vm793 = vmand %vm789, %vm791
  %vm794 = vmand %vm790, %vm792
  %vm795 = vmor %vm775, %vm793
  %vm796 = vmor %vm776, %vm794
  %v797 = vmul.f32 %v766, 0.5
  %v798 = vmul.f32 %v767, 0.5
  %v799 = vsel %vm795, 1, 0
  %v800 = vsel %vm796, 1, 0
  %vm801 = vcmp.eq.s32.totalorder %v799, 1
  %vm802 = vcmp.eq.s32.totalorder %v800, 1
  %v803 = vsel %vm801, %v797, %v766
  %v804 = vsel %vm802, %v798, %v767
  %v805 = vtanh.pop %v803
  %v806 = vtanh.pop %v804
  %v807 = vmul.f32 %v805, 0.5
  %v808 = vmul.f32 %v806, 0.5
  %v809 = vadd.f32 %v807, 0.5
  %v810 = vadd.f32 %v808, 0.5
  %v811 = vsel %vm801, %v809, %v805
  %v812 = vsel %vm802, %v810, %v806
  %v813 = vsel %vm781, 1, 0
  %v814 = vsel %vm782, 1, 0
  %vm815 = vcmp.eq.s32.totalorder %v813, 1
  %vm816 = vcmp.eq.s32.totalorder %v814, 1
  %v817 = vsel %vm815, %v766, -1e+30
  %v818 = vsel %vm816, %v767, -1e+30
  %v819 = vsel %vm721, %v818, -inf
  %v820 = vmax.f32 %v817, %v819
  %v821 = vrot.slane %v820, 4
  %v822 = vmax.f32 %v820, %v821
  %v823 = vrot.slane %v822, 2
  %v824 = vmax.f32 %v822, %v823
  %v825 = vrot.slane %v824, 1
  %v826 = vmax.f32 %v824, %v825
  %v827 = vsel %vm815, %v826, %v766
  %v828 = vsel %vm816, %v826, %v767
  %v829 = vsel %vm787, 1, 0
  %v830 = vsel %vm788, 1, 0
  %vm831 = vcmp.eq.s32.totalorder %v829, 1
  %vm832 = vcmp.eq.s32.totalorder %v830, 1
  %v833 = vsel %vm831, %v766, -1e+30
  %v834 = vsel %vm832, %v767, -1e+30
  %v835 = vsel %vm721, %v834, -inf
  %v836 = vmax.f32 %v833, %v835
  %v837 = vrot.slane %v836, 4
  %v838 = vmax.f32 %v836, %v837
  %v839 = vrot.slane %v838, 2
  %v840 = vmax.f32 %v838, %v839
  %v841 = vrot.slane %v840, 1
  %v842 = vmax.f32 %v840, %v841
  %v843 = vsel %vm831, %v842, %v827
  %v844 = vsel %vm832, %v842, %v828
  %v845 = vsub.f32 %v766, %v843
  %v846 = vsub.f32 %v767, %v844
  %v847 = vmul.f32 %v845, 1.442695
  %v848 = vpow.pop %v847
  %v849 = vmul.f32 %v846, 1.442695
  %v850 = vpow.pop %v849
  %v851 = vsel %vm815, %v848, 0.0
  %v852 = vsel %vm816, %v850, 0.0
  %v853 = vsel %vm721, %v852, 0.0
  %v854 = vadd.f32 %v851, %v853
  %v855 = vrot.slane %v854, 4
  %v856 = vadd.f32 %v854, %v855
  %v857 = vrot.slane %v856, 2
  %v858 = vadd.f32 %v856, %v857
  %v859 = vrot.slane %v858, 1
  %v860 = vadd.f32 %v858, %v859
  %v861 = vrcp.pop %v860
  %v862 = vmul.f32 %v860, %v861
  %v863 = vsub.f32 2.0, %v862
  %v864 = vmul.f32 %v861, %v863
  %v865 = vmul.f32 %v851, %v864
  %v866 = vmul.f32 %v852, %v864
  %v867 = vsel %vm831, %v848, 0.0
  %v868 = vsel %vm832, %v850, 0.0
  %v869 = vsel %vm721, %v868, 0.0
  %v870 = vadd.f32 %v867, %v869
  %v871 = vrot.slane %v870, 4
  %v872 = vadd.f32 %v870, %v871
  %v873 = vrot.slane %v872, 2
  %v874 = vadd.f32 %v872, %v873
  %v875 = vrot.slane %v874, 1
  %v876 = vadd.f32 %v874, %v875
  %v877 = vrcp.pop %v876
  %v878 = vmul.f32 %v876, %v877
  %v879 = vsub.f32 2.0, %v878
  %v880 = vmul.f32 %v877, %v879
  %v881 = vmul.f32 %v867, %v880
  %v882 = vmul.f32 %v868, %v880
  %v883 = vadd.f32 %v865, %v881
  %v884 = vadd.f32 %v866, %v882
  %vm885 = vmor %vm781, %vm787
  %vm886 = vmor %vm782, %vm788
  %v887 = vsel %vm885, 1, 0
  %v888 = vsel %vm886, 1, 0
  %vm889 = vcmp.eq.s32.totalorder %v887, 1
  %vm890 = vcmp.eq.s32.totalorder %v888, 1
  %v891 = vsel %vm889, %v883, %v811
  %v892 = vsel %vm890, %v884, %v812
  %893 = vst [vmem:[%s6] sm:$0xff] %v891
  %894 = vst [vmem:[%s6 + $0x8] sm:$0x1f] %v892
  // Predicated region
  $region26: #{vgan_generator_forward.1} parent=0 // pred_check
    _
  $region27: #{vgan_generator_forward.1} parent=0 // pred_check_branch
    %896 = sbr.rel (0) target = $region29
  $region28: #{vgan_generator_forward.1} parent=0 // pred_region
    _
  $region29: #{vgan_generator_forward.1} parent=0 // pred_fallthru
    _
  // Predicated region
  $region30: #{vgan_generator_forward.1} parent=0 // pred_check
    _
  $region31: #{vgan_generator_forward.1} parent=0 // pred_check_branch
    %898 = sbr.rel (0) target = $region33
  $region32: #{vgan_generator_forward.1} parent=0 // pred_region
    _
  $region33: #{vgan_generator_forward.1} parent=0 // pred_fallthru
    _

</llo_original>
